<compile_context>
chip_gen: v5e
topology: v5e:2x2
jax: 0.10.0
libtpu: 0.0.40
codegen_flags: <defaults>
</compile_context>

<pallas_src>
import jax
import jax.numpy as jnp
from jax.experimental import pallas as pl
from jax.experimental.pallas import tpu as pltpu


# ----------------------------------------------------------------------------
# Pallas kernel: one lane-dense VMEM tile * one SMEM scalar.
# ----------------------------------------------------------------------------
def scale_kernel(x_ref, s_ref, o_ref):
    # x: (tm, lane) VMEM tile; s: (1,) f32 in SMEM.
    o_ref[...] = (x_ref[...] * s_ref[0]).astype(o_ref.dtype)


# ----------------------------------------------------------------------------
# Generation-aware configuration.
# ----------------------------------------------------------------------------
def _round_up(a, b):
    return -(-a // b) * b


def _tpu_config():
    """Returns (num_tensorcores, per-tile byte budget, vmem_limit_bytes|None)."""
    kind = ""
    try:
        kind = jax.devices()[0].device_kind.lower()
    except Exception:
        pass
    if "v7" in kind or "tpu7" in kind:
        # 2 TCs/chip, 64 MiB VMEM/TC, ~3.2 TB/s HBM: big, evenly-split tiles.
        return 2, 8 * 2**20, 48 * 2**20
    if "v6" in kind:
        # Single TC, 128 MiB VMEM: one big block when it fits.
        return 1, 8 * 2**20, 64 * 2**20
    if ("v5 lite" in kind) or ("v5e" in kind) or ("v5litepod" in kind):
        # Single TC, 16 MiB scoped-VMEM default: keep 4x tile under it.
        return 1, 3 * 2**20, None
    if ("v4" in kind) or ("v5" in kind):
        # Megacore chips (2 TCs), plenty of VMEM.
        return 2, 8 * 2**20, 64 * 2**20
    # Unknown chip: conservative defaults.
    return 1, 3 * 2**20, None


def _pick_lane(n):
    for lane in (512, 256, 128):
        if n % lane == 0:
            return lane
    return None


# ----------------------------------------------------------------------------
# Lane-dense 2D scale: x2 is (rows, lane) with lane a multiple of 128.
# ----------------------------------------------------------------------------
def _scale_2d(x2, s, out_dtype):
    rows, lane = x2.shape
    itemsize = jnp.dtype(x2.dtype).itemsize
    out_itemsize = jnp.dtype(out_dtype).itemsize
    sub = max(8, 32 // itemsize)  # 8 for f32, 16 for bf16, 32 for int8/fp8

    num_cores, budget_bytes, vmem_limit = _tpu_config()

    # Largest row-tile (multiple of `sub`) under the byte budget.
    tm_max = max(sub, (budget_bytes // (lane * itemsize)) // sub * sub)
    nblocks = pl.cdiv(rows, tm_max)
    if num_cores >= 2 and rows >= num_cores * sub:
        # Megacore: at least num_cores blocks, balanced across TensorCores.
        nblocks = _round_up(max(nblocks, num_cores), num_cores)
    tm = min(rows, _round_up(pl.cdiv(rows, nblocks), sub))
    grid = (pl.cdiv(rows, tm),)

    cost = pl.CostEstimate(
        flops=rows * lane,
        transcendentals=0,
        bytes_accessed=rows * lane * (itemsize + out_itemsize) + 4,
    )
    cp_kwargs = dict(dimension_semantics=("parallel",))
    if vmem_limit is not None:
        cp_kwargs["vmem_limit_bytes"] = vmem_limit

    return pl.pallas_call(
        scale_kernel,
        out_shape=jax.ShapeDtypeStruct((rows, lane), out_dtype),
        grid=grid,
        in_specs=[
            pl.BlockSpec((tm, lane), lambda i: (i, 0)),
            pl.BlockSpec(memory_space=pltpu.MemorySpace.SMEM),
        ],
        out_specs=pl.BlockSpec((tm, lane), lambda i: (i, 0)),
        compiler_params=pltpu.CompilerParams(**cp_kwargs),
        cost_estimate=cost,
    )(x2, s)


# ----------------------------------------------------------------------------
# ScaleLayer.forward
# ----------------------------------------------------------------------------
def scale_layer(x, scale):
    """ScaleLayer.forward: x * scale (scale is a 1-element f32 parameter)."""
    orig_shape = x.shape
    out_dtype = jnp.promote_types(x.dtype, jnp.float32)
    s = jnp.asarray(scale, jnp.float32).reshape(1)
    n = x.size
    flat = x.reshape(-1)

    lane = _pick_lane(n)
    if lane is not None:
        out = _scale_2d(flat.reshape(n // lane, lane), s, out_dtype)
        return out.reshape(orig_shape)

    # Non-128-aligned element count: run the kernel on the aligned prefix and
    # scale the tiny (<128-element) tail with plain jnp (no full-array pad /
    # slice passes over HBM).
    n_main = (n // 128) * 128
    if n_main == 0:
        return (flat.astype(out_dtype) * s[0]).reshape(orig_shape)
    lane = _pick_lane(n_main)
    main = _scale_2d(flat[:n_main].reshape(n_main // lane, lane), s, out_dtype)
    tail = flat[n_main:].astype(out_dtype) * s[0]
    return jnp.concatenate([main.reshape(-1), tail]).reshape(orig_shape)


# ----------------------------------------------------------------------------
# Pure-JAX reference (matches PyTorch promotion: scale is an f32 tensor).
# ----------------------------------------------------------------------------
def reference_forward(x, scale):
    s = jnp.asarray(scale, jnp.float32).reshape(1)[0]
    return x.astype(jnp.promote_types(x.dtype, jnp.float32)) * s


# ----------------------------------------------------------------------------
# Test
# ----------------------------------------------------------------------------
if __name__ == "__main__":
    key = jax.random.PRNGKey(0)
    k1, k2, k3 = jax.random.split(key, 3)

    # ScaleLayer parameter: init_value = 2.0
    scale = jnp.array([2.0], jnp.float32)

    # Aligned 4D f32 input.
    x1 = jax.random.normal(k1, (2, 4, 16, 16), jnp.float32)
    out1 = jax.block_until_ready(scale_layer(x1, scale))
    ref1 = jax.block_until_ready(reference_forward(x1, scale))
    assert out1.shape == x1.shape and out1.dtype == jnp.float32
    assert bool(jnp.all(jnp.isfinite(out1)))
    assert bool(jnp.allclose(out1, ref1, rtol=1e-6, atol=1e-6)), (
        float(jnp.max(jnp.abs(out1 - ref1)))
    )

    # Non-aligned shape exercises the prefix + tail path.
    x2 = jax.random.normal(k2, (3, 5, 7, 9), jnp.float32)
    out2 = jax.block_until_ready(scale_layer(x2, scale))
    ref2 = jax.block_until_ready(reference_forward(x2, scale))
    assert out2.shape == x2.shape
    assert bool(jnp.allclose(out2, ref2, rtol=1e-6, atol=1e-6)), (
        float(jnp.max(jnp.abs(out2 - ref2)))
    )

    # bf16 input: output promotes to f32 (scale is an f32 parameter).
    x3 = jax.random.normal(k3, (2, 8, 16, 16), jnp.float32).astype(jnp.bfloat16)
    out3 = jax.block_until_ready(scale_layer(x3, scale))
    ref3 = jax.block_until_ready(reference_forward(x3, scale))
    assert out3.shape == x3.shape and out3.dtype == jnp.float32
    assert bool(jnp.allclose(out3, ref3, rtol=1e-6, atol=1e-6)), (
        float(jnp.max(jnp.abs(out3 - ref3)))
    )

    print("KERNEL_OK")
</pallas_src>

<mosaic_0001>
module attributes {stable_mosaic.version = 11 : i64} {
  func.func @scale_kernel(%arg0: i32, %arg1: memref<4x512xf32, #tpu.memory_space<vmem>>, %arg2: memref<1xf32, #tpu.memory_space<smem>>, %arg3: memref<4x512xf32, #tpu.memory_space<vmem>>) attributes {dimension_semantics = [#tpu.dimension_semantics<parallel>], iteration_bounds = array<i64: 1>, scalar_prefetch = 0 : i64, scratch_operands = 0 : i64, tpu.core_type = #tpu.core_type<tc>, window_params = [{transform_indices = @transform_0, window_bounds = array<i64: 4, 512>}, {transform_indices = @transform_1, window_bounds = array<i64: 1>}, {transform_indices = @transform_2, window_bounds = array<i64: 4, 512>}]} {
    %c0 = arith.constant 0 : index
    %c0_0 = arith.constant 0 : index
    %0 = vector.load %arg1[%c0, %c0_0] : memref<4x512xf32, #tpu.memory_space<vmem>>, vector<4x512xf32>
    %c0_1 = arith.constant 0 : index
    %1 = memref.load %arg2[%c0_1] : memref<1xf32, #tpu.memory_space<smem>>
    %2 = vector.broadcast %1 : f32 to vector<4x512xf32>
    %3 = arith.mulf %0, %2 : vector<4x512xf32>
    %c0_2 = arith.constant 0 : index
    %c0_3 = arith.constant 0 : index
    %4 = vector.load %arg3[%c0_2, %c0_3] : memref<4x512xf32, #tpu.memory_space<vmem>>, vector<4x512xf32>
    tpu.vector_store %arg3[%c0_2, %c0_3], %3 {strides = array<i32>} : memref<4x512xf32, #tpu.memory_space<vmem>>, vector<4x512xf32>,
    return
  }
  func.func @transform_0(%arg0: i32) -> (i32, i32) {
    %c0_i32 = arith.constant 0 : i32
    %c0_i32_0 = arith.constant 0 : i32
    return %arg0, %c0_i32 : i32, i32
  }
  func.func @transform_1(%arg0: i32) -> i32 {
    %c0_i32 = arith.constant 0 : i32
    %c0_i32_0 = arith.constant 0 : i32
    return %c0_i32 : i32
  }
  func.func @transform_2(%arg0: i32) -> (i32, i32) {
    %c0_i32 = arith.constant 0 : i32
    %c0_i32_0 = arith.constant 0 : i32
    return %arg0, %c0_i32 : i32, i32
  }
}

</mosaic_0001>

<llo_original>
// kernel: tpu_custom_call.1
$region0: #{tpu_custom_call.1}
  #allocation0 [shape = 'u32[]', space=smem, size = 0x4, offset = 0x4, fixed_abs, tag = 'smem constant byte address 0x4 - core index']
  #allocation1 [shape = 'u32[72,128]{1,0:T(1,128)}', space=vmem, size = 0x9000, scoped, tag = 'internal scratch']
  #allocation2 [shape = 'f32[1]{0:T(128)S(6)}', space=smem, size = 0x200, scoped, tag = 'scoped memory for tpu_custom_call.1']
  %s0 = inlined_call_operand.hbm [shape: f32[4,512], index: 0, kind: input, shape index: {}]
  %s1 = inlined_call_operand.<no memory space> [shape: f32[1], index: 1, kind: input, shape index: {}]
  %s2 = inlined_call_operand.hbm [shape: f32[4,512], index: 2, kind: output, shape index: {}]
  %s3 = sld [smem:[#allocation0]]
  $region22: #{tpu_custom_call.1} parent=0
    _
  %s5 = ssub.s32 1, %s3
  %s6 = scalar_select 0, %s5, %s3
  %7 = sst [smem:[#allocation2]] %s1
  $region1: #{tpu_custom_call.1} parent=0
    #allocation3 [shape = 'u8[8192]{0}', space=vmem, size = 0x2000, scoped, tag = 'input window, operand 0, single buffered']
    #allocation4 [shape = 's32[1]{0}', space=sflag, size = 0x4, scoped, tag = 'scoped memory for tpu_custom_call.1']
    #allocation5 [shape = 's32[1]{0}', space=sflag, size = 0x4, scoped, tag = 'scoped memory for tpu_custom_call.1']
    #allocation6 [shape = 'u8[8192]{0}', space=vmem, size = 0x2000, scoped, tag = 'output window, operand 0, single buffered']
    %8 = vsyncpa [#allocation4], 0
    %9 = vsyncpa [#allocation5], 0
    // Predicated region
    $region2: #{tpu_custom_call.1} parent=1 // pred_check
      _
    $region3: #{tpu_custom_call.1} parent=1 // pred_check_branch
      %11 = sbr.rel (0) target = $region5
    $region4: #{tpu_custom_call.1} parent=1 // pred_region
      %13 = vsyncadd [#allocation4], 0
      %s15 = sshll.u32 %s0, 4
      %s16 = int_to_ptr.hbm [resolvable:$true] %s15
      %s17 = sshll.u32 [#allocation3], 4
      %s18 = int_to_ptr.vmem [resolvable:$true] %s17
      %20 = dma.hbm_to_vmem [thread:$0]  %s16, 256, %s18, [#allocation4]
    $region5: #{tpu_custom_call.1} parent=1 // pred_fallthru
      _
    // Predicated region
    $region6: #{tpu_custom_call.1} parent=1 // pred_check
      _
    $region7: #{tpu_custom_call.1} parent=1 // pred_check_branch
      %22 = sbr.rel (0) target = $region9
    $region8: #{tpu_custom_call.1} parent=1 // pred_region
      _
    $region9: #{tpu_custom_call.1} parent=1 // pred_fallthru
      _
    // Predicated region
    $region10: #{tpu_custom_call.1} parent=1 // pred_check
      _
    $region11: #{tpu_custom_call.1} parent=1 // pred_check_branch
      %24 = sbr.rel (0) target = $region13
    $region12: #{tpu_custom_call.1} parent=1 // pred_region
      %26 = dma.done [#allocation4], 256
    $region13: #{tpu_custom_call.1} parent=1 // pred_fallthru
      _
    %v27 = vld [vmem:[#allocation3] sm:$0xff]
    %v28 = vld [vmem:[#allocation3 + $0x8] sm:$0xff]
    %s29 = sld [smem:[#allocation2]]
    %v30 = vstv %s29
    %v31 = vmul.f32 %v27, %v30
    %v32 = vmul.f32 %v28, %v30
    %33 = vst [vmem:[#allocation6] sm:$0xff] %v31
    %34 = vst [vmem:[#allocation6 + $0x8] sm:$0xff] %v32
    // Predicated region
    $region14: #{tpu_custom_call.1} parent=1 // pred_check
      _
    $region15: #{tpu_custom_call.1} parent=1 // pred_check_branch
      %36 = sbr.rel (0) target = $region17
    $region16: #{tpu_custom_call.1} parent=1 // pred_region
      %38 = vsyncadd [#allocation5], 0
      %s40 = sshll.u32 [#allocation6], 4
      %s41 = int_to_ptr.vmem [resolvable:$true] %s40
      %s42 = sshll.u32 %s2, 4
      %s43 = int_to_ptr.hbm [resolvable:$true] %s42
      %45 = dma.vmem_to_hbm [thread:$0]  %s41, 256, %s43, [#allocation5]
    $region17: #{tpu_custom_call.1} parent=1 // pred_fallthru
      _
    // Predicated region
    $region18: #{tpu_custom_call.1} parent=1 // pred_check
      _
    $region19: #{tpu_custom_call.1} parent=1 // pred_check_branch
      %47 = sbr.rel (0) target = $region21
    $region20: #{tpu_custom_call.1} parent=1 // pred_region
      %49 = dma.done [#allocation5], 256
    $region21: #{tpu_custom_call.1} parent=1 // pred_fallthru
      _
    %50 = vsyncpa [#allocation4], 1
    %51 = vsyncpa [#allocation5], 1

</llo_original>
